<compile_context>
chip_gen: v5e
topology: v5e:2x2
jax: 0.10.0
libtpu: 0.0.40
codegen_flags: <defaults>
</compile_context>

<pallas_src>
import math

import jax
import jax.numpy as jnp
import numpy as np
from jax.experimental import pallas as pl
from jax.experimental.pallas import tpu as pltpu  # noqa: F401  (TPU backend import)


def _interp_matrix(n_in, n_out):
    """Row-interpolation matrix (n_out, n_in) for bilinear, align_corners=True (f32)."""
    m = np.zeros((n_out, n_in), dtype=np.float32)
    if n_out == 1 or n_in == 1:
        m[:, 0] = 1.0
        return m
    scale = (n_in - 1) / (n_out - 1)
    for i in range(n_out):
        s = i * scale
        i0 = min(int(np.floor(s)), n_in - 1)
        i1 = min(i0 + 1, n_in - 1)
        frac = s - i0
        m[i, i0] += 1.0 - frac
        m[i, i1] += frac
    return m


def _upsample_conv_kernel(xf_ref, rT_ref, wblk_ref, bias_ref, o_ref):
    # Upsample: (B*C_in, H*W) @ (H*W, Ho*Wo) -> (B*C_in, Ho*Wo), f32 accumulation.
    up = jnp.dot(xf_ref[...], rT_ref[...], preferred_element_type=jnp.float32)
    # 1x1 conv (block-diagonal over batch): (B*C_out, B*C_in) @ (B*C_in, Ho*Wo).
    out = jnp.dot(wblk_ref[...], up.astype(wblk_ref.dtype),
                  preferred_element_type=jnp.float32)
    # Lane-dense epilogue: f32 bias add, cast, full-lane store (N = Ho*Wo = 8*128 lanes).
    o_ref[...] = (out + bias_ref[...]).astype(o_ref.dtype)


def bilinear_interpolation(x, weight, bias, scale=2, matmul_dtype=None):
    """Upsample(scale, bilinear, align_corners=True) -> Conv2d(C_in, C_out, 1). NCHW."""
    B, C_in, H, W = x.shape
    C_out = weight.shape[0]
    H_out, W_out = H * scale, W * scale

    # Dense combined interpolation matrix, built in f32 (review correctness concern).
    rh = _interp_matrix(H, H_out)                       # (H_out, H)
    rw = _interp_matrix(W, W_out)                       # (W_out, W)
    rT = jnp.asarray(np.kron(rh, rw).T)                 # (H*W, H_out*W_out), f32

    # Block-diagonal conv weight so the channel matmul keeps batch folded in M.
    wmat = weight.reshape(C_out, C_in).astype(jnp.float32)
    wblk = jnp.kron(jnp.eye(B, dtype=jnp.float32), wmat)       # (B*C_out, B*C_in)
    bias_blk = jnp.tile(bias.astype(jnp.float32), B).reshape(B * C_out, 1)

    # Matmul operand dtype: defaults to x.dtype (f32 for the test). For bf16 MXU speed
    # on v6e/v7x pass matmul_dtype=jnp.bfloat16 and re-validate tolerance.
    cdt = jnp.dtype(matmul_dtype) if matmul_dtype is not None else x.dtype
    xf = x.reshape(B * C_in, H * W).astype(cdt)         # lane-dense slab (free reshape)
    rT = rT.astype(cdt)
    wblk = wblk.astype(cdt)

    # Single kernel invocation (no grid): everything fits trivially in VMEM
    # (~1.3 MiB total), so whole-array VMEM refs with no pipeline are optimal here.
    out2d = pl.pallas_call(
        _upsample_conv_kernel,
        out_shape=jax.ShapeDtypeStruct((B * C_out, H_out * W_out), x.dtype),
    )(xf, rT, wblk, bias_blk)

    # Free reshape back to NCHW (rows are ordered (b, c_out), lanes are (h_out, w_out)).
    return out2d.reshape(B, C_out, H_out, W_out)


if __name__ == "__main__":
    B, C_in, C_out, H, W = 2, 4, 8, 16, 16
    scale = 2

    key = jax.random.PRNGKey(0)
    kx, kw, kb = jax.random.split(key, 3)
    x = jax.random.normal(kx, (B, C_in, H, W), dtype=jnp.float32)

    # Deterministic Conv2d(C_in, C_out, 1) params (PyTorch-style uniform bound).
    bound = 1.0 / math.sqrt(C_in * 1 * 1)
    weight = jax.random.uniform(kw, (C_out, C_in, 1, 1),
                                minval=-bound, maxval=bound, dtype=jnp.float32)
    bias = jax.random.uniform(kb, (C_out,),
                              minval=-bound, maxval=bound, dtype=jnp.float32)

    out = bilinear_interpolation(x, weight, bias, scale=scale)
    out = jax.block_until_ready(out)
    assert out.shape == (B, C_out, H * scale, W * scale)

    # Pure-JAX reference: bilinear upsample (align_corners=True) then 1x1 conv + bias.
    rh_ref = jnp.asarray(_interp_matrix(H, H * scale))
    rw_ref = jnp.asarray(_interp_matrix(W, W * scale))
    up_ref = jnp.einsum('oh,bchw,pw->bcop', rh_ref, x, rw_ref)
    ref = jnp.einsum('kc,bchw->bkhw', weight.reshape(C_out, C_in), up_ref)
    ref = ref + bias[None, :, None, None]
    np.testing.assert_allclose(np.asarray(out), np.asarray(ref), atol=1e-3, rtol=1e-3)

    print("KERNEL_OK")
</pallas_src>

<mosaic_0001>
module attributes {stable_mosaic.version = 11 : i64} {
  func.func @_upsample_conv_kernel(%arg0: memref<8x256xf32, #tpu.memory_space<vmem>>, %arg1: memref<256x1024xf32, #tpu.memory_space<vmem>>, %arg2: memref<16x8xf32, #tpu.memory_space<vmem>>, %arg3: memref<16x1xf32, #tpu.memory_space<vmem>>, %arg4: memref<16x1024xf32, #tpu.memory_space<vmem>>) attributes {dimension_semantics = [], scalar_prefetch = 0 : i64, scratch_operands = 0 : i64, tpu.core_type = #tpu.core_type<tc>} {
    %c0 = arith.constant 0 : index
    %c0_0 = arith.constant 0 : index
    %0 = vector.load %arg0[%c0, %c0_0] : memref<8x256xf32, #tpu.memory_space<vmem>>, vector<8x256xf32>
    %c0_1 = arith.constant 0 : index
    %c0_2 = arith.constant 0 : index
    %1 = vector.load %arg1[%c0_1, %c0_2] : memref<256x1024xf32, #tpu.memory_space<vmem>>, vector<256x1024xf32>
    %cst = arith.constant dense<0.000000e+00> : vector<8x1024xf32>
    %2 = tpu.matmul %0, %1, %cst {dimension_numbers = #tpu.dot_dimension_numbers<[1], [0], [0], [1], [0, 0, 1, 1], [], []>} : vector<8x256xf32>, vector<256x1024xf32>, vector<8x1024xf32> -> vector<8x1024xf32>
    %c0_3 = arith.constant 0 : index
    %c0_4 = arith.constant 0 : index
    %3 = vector.load %arg2[%c0_3, %c0_4] : memref<16x8xf32, #tpu.memory_space<vmem>>, vector<16x8xf32>
    %cst_5 = arith.constant dense<0.000000e+00> : vector<16x1024xf32>
    %4 = tpu.matmul %3, %2, %cst_5 {dimension_numbers = #tpu.dot_dimension_numbers<[1], [0], [0], [1], [0, 0, 1, 1], [], []>} : vector<16x8xf32>, vector<8x1024xf32>, vector<16x1024xf32> -> vector<16x1024xf32>
    %c0_6 = arith.constant 0 : index
    %c0_7 = arith.constant 0 : index
    %5 = vector.load %arg3[%c0_6, %c0_7] : memref<16x1xf32, #tpu.memory_space<vmem>>, vector<16x1xf32>
    %6 = vector.broadcast %5 : vector<16x1xf32> to vector<16x1024xf32>
    %7 = arith.addf %4, %6 : vector<16x1024xf32>
    %c0_8 = arith.constant 0 : index
    %c0_9 = arith.constant 0 : index
    %8 = vector.load %arg4[%c0_8, %c0_9] : memref<16x1024xf32, #tpu.memory_space<vmem>>, vector<16x1024xf32>
    tpu.vector_store %arg4[%c0_8, %c0_9], %7 {strides = array<i32>} : memref<16x1024xf32, #tpu.memory_space<vmem>>, vector<16x1024xf32>,
    return
  }
}

</mosaic_0001>

<llo_original>
// kernel: tpu_custom_call.1
$region0: #{tpu_custom_call.1}
  #allocation0 [shape = 'u32[]', space=smem, size = 0x4, offset = 0x4, fixed_abs, tag = 'smem constant byte address 0x4 - core index']
  #allocation1 [shape = 'u32[72,128]{1,0:T(1,128)}', space=vmem, size = 0x9000, scoped, tag = 'internal scratch']
  %s0 = inlined_call_operand.vmem [shape: f32[8,256], index: 0, kind: input, shape index: {}]
  %s1 = inlined_call_operand.hbm [shape: f32[256,1024], index: 1, kind: input, shape index: {}]
  %s2 = inlined_call_operand.vmem [shape: f32[16,8], index: 2, kind: input, shape index: {}]
  %s3 = inlined_call_operand.vmem [shape: f32[16,1], index: 3, kind: input, shape index: {}]
  %s4 = inlined_call_operand.hbm [shape: f32[16,1024], index: 4, kind: output, shape index: {}]
  %s5 = sld [smem:[#allocation0]]
  $region30: #{tpu_custom_call.1} parent=0
    _
  %s7 = ssub.s32 1, %s5
  %s8 = scalar_select 0, %s7, %s5
  $region1: #{tpu_custom_call.1} parent=0
    #allocation2 [shape = 'u8[1048576]{0}', space=vmem, size = 0x100000, scoped, tag = 'input window, operand 1, single buffered']
    #allocation3 [shape = 's32[1]{0}', space=sflag, size = 0x4, scoped, tag = 'scoped memory for tpu_custom_call.1']
    #allocation4 [shape = 's32[1]{0}', space=sflag, size = 0x4, scoped, tag = 'scoped memory for tpu_custom_call.1']
    #allocation5 [shape = 'u8[65536]{0}', space=vmem, size = 0x10000, scoped, tag = 'output window, operand 0, single buffered']
    %9 = vsyncpa [#allocation3], 0
    %10 = vsyncpa [#allocation4], 0
    // Predicated region
    $region2: #{tpu_custom_call.1} parent=1 // pred_check
      _
    $region3: #{tpu_custom_call.1} parent=1 // pred_check_branch
      %12 = sbr.rel (0) target = $region5
    $region4: #{tpu_custom_call.1} parent=1 // pred_region
      _
    $region5: #{tpu_custom_call.1} parent=1 // pred_fallthru
      _
    // Predicated region
    $region6: #{tpu_custom_call.1} parent=1 // pred_check
      _
    $region7: #{tpu_custom_call.1} parent=1 // pred_check_branch
      %14 = sbr.rel (0) target = $region9
    $region8: #{tpu_custom_call.1} parent=1 // pred_region
      %16 = vsyncadd [#allocation3], 0
      %s17 = sshll.u32 %s1, 4
      %s18 = int_to_ptr.hbm [resolvable:$true] %s17
      %s19 = sshll.u32 [#allocation2], 4
      %s20 = int_to_ptr.vmem [resolvable:$true] %s19
      %25 = dma.hbm_to_vmem [thread:$0]  %s18, 32768, %s20, [#allocation3], 1024, 1024, 64
    $region9: #{tpu_custom_call.1} parent=1 // pred_fallthru
      _
    // Predicated region
    $region10: #{tpu_custom_call.1} parent=1 // pred_check
      _
    $region11: #{tpu_custom_call.1} parent=1 // pred_check_branch
      %27 = sbr.rel (0) target = $region13
    $region12: #{tpu_custom_call.1} parent=1 // pred_region
      _
    $region13: #{tpu_custom_call.1} parent=1 // pred_fallthru
      _
    // Predicated region
    $region14: #{tpu_custom_call.1} parent=1 // pred_check
      _
    $region15: #{tpu_custom_call.1} parent=1 // pred_check_branch
      %29 = sbr.rel (0) target = $region17
    $region16: #{tpu_custom_call.1} parent=1 // pred_region
      _
    $region17: #{tpu_custom_call.1} parent=1 // pred_fallthru
      _
    // Predicated region
    $region18: #{tpu_custom_call.1} parent=1 // pred_check
      _
    $region19: #{tpu_custom_call.1} parent=1 // pred_check_branch
      %31 = sbr.rel (0) target = $region21
    $region20: #{tpu_custom_call.1} parent=1 // pred_region
      %33 = dma.done [#allocation3], 32768
    $region21: #{tpu_custom_call.1} parent=1 // pred_fallthru
      _
    %v34 = vld [vmem:[%s0] sm:$0xff]
    %v35 = vld [vmem:[%s0 + $0x8] sm:$0xff]
    %v36 = vld [vmem:[#allocation2] sm:$0xff]
    %v37 = vld [vmem:[#allocation2 + $0x8] sm:$0xff]
    %v38 = vld [vmem:[#allocation2 + $0x10] sm:$0xff]
    %v39 = vld [vmem:[#allocation2 + $0x18] sm:$0xff]
    %v40 = vld [vmem:[#allocation2 + $0x20] sm:$0xff]
    %v41 = vld [vmem:[#allocation2 + $0x28] sm:$0xff]
    %v42 = vld [vmem:[#allocation2 + $0x30] sm:$0xff]
    %v43 = vld [vmem:[#allocation2 + $0x38] sm:$0xff]
    %v44 = vld [vmem:[#allocation2 + $0x40] sm:$0xff]
    %v45 = vld [vmem:[#allocation2 + $0x48] sm:$0xff]
    %v46 = vld [vmem:[#allocation2 + $0x50] sm:$0xff]
    %v47 = vld [vmem:[#allocation2 + $0x58] sm:$0xff]
    %v48 = vld [vmem:[#allocation2 + $0x60] sm:$0xff]
    %v49 = vld [vmem:[#allocation2 + $0x68] sm:$0xff]
    %v50 = vld [vmem:[#allocation2 + $0x70] sm:$0xff]
    %v51 = vld [vmem:[#allocation2 + $0x78] sm:$0xff]
    %v52 = vld [vmem:[#allocation2 + $0x80] sm:$0xff]
    %v53 = vld [vmem:[#allocation2 + $0x88] sm:$0xff]
    %v54 = vld [vmem:[#allocation2 + $0x90] sm:$0xff]
    %v55 = vld [vmem:[#allocation2 + $0x98] sm:$0xff]
    %v56 = vld [vmem:[#allocation2 + $0xa0] sm:$0xff]
    %v57 = vld [vmem:[#allocation2 + $0xa8] sm:$0xff]
    %v58 = vld [vmem:[#allocation2 + $0xb0] sm:$0xff]
    %v59 = vld [vmem:[#allocation2 + $0xb8] sm:$0xff]
    %v60 = vld [vmem:[#allocation2 + $0xc0] sm:$0xff]
    %v61 = vld [vmem:[#allocation2 + $0xc8] sm:$0xff]
    %v62 = vld [vmem:[#allocation2 + $0xd0] sm:$0xff]
    %v63 = vld [vmem:[#allocation2 + $0xd8] sm:$0xff]
    %v64 = vld [vmem:[#allocation2 + $0xe0] sm:$0xff]
    %v65 = vld [vmem:[#allocation2 + $0xe8] sm:$0xff]
    %v66 = vld [vmem:[#allocation2 + $0xf0] sm:$0xff]
    %v67 = vld [vmem:[#allocation2 + $0xf8] sm:$0xff]
    %v68 = vld [vmem:[#allocation2 + $0x100] sm:$0xff]
    %v69 = vld [vmem:[#allocation2 + $0x108] sm:$0xff]
    %v70 = vld [vmem:[#allocation2 + $0x110] sm:$0xff]
    %v71 = vld [vmem:[#allocation2 + $0x118] sm:$0xff]
    %v72 = vld [vmem:[#allocation2 + $0x120] sm:$0xff]
    %v73 = vld [vmem:[#allocation2 + $0x128] sm:$0xff]
    %v74 = vld [vmem:[#allocation2 + $0x130] sm:$0xff]
    %v75 = vld [vmem:[#allocation2 + $0x138] sm:$0xff]
    %v76 = vld [vmem:[#allocation2 + $0x140] sm:$0xff]
    %v77 = vld [vmem:[#allocation2 + $0x148] sm:$0xff]
    %v78 = vld [vmem:[#allocation2 + $0x150] sm:$0xff]
    %v79 = vld [vmem:[#allocation2 + $0x158] sm:$0xff]
    %v80 = vld [vmem:[#allocation2 + $0x160] sm:$0xff]
    %v81 = vld [vmem:[#allocation2 + $0x168] sm:$0xff]
    %v82 = vld [vmem:[#allocation2 + $0x170] sm:$0xff]
    %v83 = vld [vmem:[#allocation2 + $0x178] sm:$0xff]
    %v84 = vld [vmem:[#allocation2 + $0x180] sm:$0xff]
    %v85 = vld [vmem:[#allocation2 + $0x188] sm:$0xff]
    %v86 = vld [vmem:[#allocation2 + $0x190] sm:$0xff]
    %v87 = vld [vmem:[#allocation2 + $0x198] sm:$0xff]
    %v88 = vld [vmem:[#allocation2 + $0x1a0] sm:$0xff]
    %v89 = vld [vmem:[#allocation2 + $0x1a8] sm:$0xff]
    %v90 = vld [vmem:[#allocation2 + $0x1b0] sm:$0xff]
    %v91 = vld [vmem:[#allocation2 + $0x1b8] sm:$0xff]
    %v92 = vld [vmem:[#allocation2 + $0x1c0] sm:$0xff]
    %v93 = vld [vmem:[#allocation2 + $0x1c8] sm:$0xff]
    %v94 = vld [vmem:[#allocation2 + $0x1d0] sm:$0xff]
    %v95 = vld [vmem:[#allocation2 + $0x1d8] sm:$0xff]
    %v96 = vld [vmem:[#allocation2 + $0x1e0] sm:$0xff]
    %v97 = vld [vmem:[#allocation2 + $0x1e8] sm:$0xff]
    %v98 = vld [vmem:[#allocation2 + $0x1f0] sm:$0xff]
    %v99 = vld [vmem:[#allocation2 + $0x1f8] sm:$0xff]
    %v100 = vld [vmem:[#allocation2 + $0x200] sm:$0xff]
    %v101 = vld [vmem:[#allocation2 + $0x208] sm:$0xff]
    %v102 = vld [vmem:[#allocation2 + $0x210] sm:$0xff]
    %v103 = vld [vmem:[#allocation2 + $0x218] sm:$0xff]
    %v104 = vld [vmem:[#allocation2 + $0x220] sm:$0xff]
    %v105 = vld [vmem:[#allocation2 + $0x228] sm:$0xff]
    %v106 = vld [vmem:[#allocation2 + $0x230] sm:$0xff]
    %v107 = vld [vmem:[#allocation2 + $0x238] sm:$0xff]
    %v108 = vld [vmem:[#allocation2 + $0x240] sm:$0xff]
    %v109 = vld [vmem:[#allocation2 + $0x248] sm:$0xff]
    %v110 = vld [vmem:[#allocation2 + $0x250] sm:$0xff]
    %v111 = vld [vmem:[#allocation2 + $0x258] sm:$0xff]
    %v112 = vld [vmem:[#allocation2 + $0x260] sm:$0xff]
    %v113 = vld [vmem:[#allocation2 + $0x268] sm:$0xff]
    %v114 = vld [vmem:[#allocation2 + $0x270] sm:$0xff]
    %v115 = vld [vmem:[#allocation2 + $0x278] sm:$0xff]
    %v116 = vld [vmem:[#allocation2 + $0x280] sm:$0xff]
    %v117 = vld [vmem:[#allocation2 + $0x288] sm:$0xff]
    %v118 = vld [vmem:[#allocation2 + $0x290] sm:$0xff]
    %v119 = vld [vmem:[#allocation2 + $0x298] sm:$0xff]
    %v120 = vld [vmem:[#allocation2 + $0x2a0] sm:$0xff]
    %v121 = vld [vmem:[#allocation2 + $0x2a8] sm:$0xff]
    %v122 = vld [vmem:[#allocation2 + $0x2b0] sm:$0xff]
    %v123 = vld [vmem:[#allocation2 + $0x2b8] sm:$0xff]
    %v124 = vld [vmem:[#allocation2 + $0x2c0] sm:$0xff]
    %v125 = vld [vmem:[#allocation2 + $0x2c8] sm:$0xff]
    %v126 = vld [vmem:[#allocation2 + $0x2d0] sm:$0xff]
    %v127 = vld [vmem:[#allocation2 + $0x2d8] sm:$0xff]
    %v128 = vld [vmem:[#allocation2 + $0x2e0] sm:$0xff]
    %v129 = vld [vmem:[#allocation2 + $0x2e8] sm:$0xff]
    %v130 = vld [vmem:[#allocation2 + $0x2f0] sm:$0xff]
    %v131 = vld [vmem:[#allocation2 + $0x2f8] sm:$0xff]
    %v132 = vld [vmem:[#allocation2 + $0x300] sm:$0xff]
    %v133 = vld [vmem:[#allocation2 + $0x308] sm:$0xff]
    %v134 = vld [vmem:[#allocation2 + $0x310] sm:$0xff]
    %v135 = vld [vmem:[#allocation2 + $0x318] sm:$0xff]
    %v136 = vld [vmem:[#allocation2 + $0x320] sm:$0xff]
    %v137 = vld [vmem:[#allocation2 + $0x328] sm:$0xff]
    %v138 = vld [vmem:[#allocation2 + $0x330] sm:$0xff]
    %v139 = vld [vmem:[#allocation2 + $0x338] sm:$0xff]
    %v140 = vld [vmem:[#allocation2 + $0x340] sm:$0xff]
    %v141 = vld [vmem:[#allocation2 + $0x348] sm:$0xff]
    %v142 = vld [vmem:[#allocation2 + $0x350] sm:$0xff]
    %v143 = vld [vmem:[#allocation2 + $0x358] sm:$0xff]
    %v144 = vld [vmem:[#allocation2 + $0x360] sm:$0xff]
    %v145 = vld [vmem:[#allocation2 + $0x368] sm:$0xff]
    %v146 = vld [vmem:[#allocation2 + $0x370] sm:$0xff]
    %v147 = vld [vmem:[#allocation2 + $0x378] sm:$0xff]
    %v148 = vld [vmem:[#allocation2 + $0x380] sm:$0xff]
    %v149 = vld [vmem:[#allocation2 + $0x388] sm:$0xff]
    %v150 = vld [vmem:[#allocation2 + $0x390] sm:$0xff]
    %v151 = vld [vmem:[#allocation2 + $0x398] sm:$0xff]
    %v152 = vld [vmem:[#allocation2 + $0x3a0] sm:$0xff]
    %v153 = vld [vmem:[#allocation2 + $0x3a8] sm:$0xff]
    %v154 = vld [vmem:[#allocation2 + $0x3b0] sm:$0xff]
    %v155 = vld [vmem:[#allocation2 + $0x3b8] sm:$0xff]
    %v156 = vld [vmem:[#allocation2 + $0x3c0] sm:$0xff]
    %v157 = vld [vmem:[#allocation2 + $0x3c8] sm:$0xff]
    %v158 = vld [vmem:[#allocation2 + $0x3d0] sm:$0xff]
    %v159 = vld [vmem:[#allocation2 + $0x3d8] sm:$0xff]
    %v160 = vld [vmem:[#allocation2 + $0x3e0] sm:$0xff]
    %v161 = vld [vmem:[#allocation2 + $0x3e8] sm:$0xff]
    %v162 = vld [vmem:[#allocation2 + $0x3f0] sm:$0xff]
    %v163 = vld [vmem:[#allocation2 + $0x3f8] sm:$0xff]
    %v164 = vld [vmem:[#allocation2 + $0x400] sm:$0xff]
    %v165 = vld [vmem:[#allocation2 + $0x408] sm:$0xff]
    %v166 = vld [vmem:[#allocation2 + $0x410] sm:$0xff]
    %v167 = vld [vmem:[#allocation2 + $0x418] sm:$0xff]
    %v168 = vld [vmem:[#allocation2 + $0x420] sm:$0xff]
    %v169 = vld [vmem:[#allocation2 + $0x428] sm:$0xff]
    %v170 = vld [vmem:[#allocation2 + $0x430] sm:$0xff]
    %v171 = vld [vmem:[#allocation2 + $0x438] sm:$0xff]
    %v172 = vld [vmem:[#allocation2 + $0x440] sm:$0xff]
    %v173 = vld [vmem:[#allocation2 + $0x448] sm:$0xff]
    %v174 = vld [vmem:[#allocation2 + $0x450] sm:$0xff]
    %v175 = vld [vmem:[#allocation2 + $0x458] sm:$0xff]
    %v176 = vld [vmem:[#allocation2 + $0x460] sm:$0xff]
    %v177 = vld [vmem:[#allocation2 + $0x468] sm:$0xff]
    %v178 = vld [vmem:[#allocation2 + $0x470] sm:$0xff]
    %v179 = vld [vmem:[#allocation2 + $0x478] sm:$0xff]
    %v180 = vld [vmem:[#allocation2 + $0x480] sm:$0xff]
    %v181 = vld [vmem:[#allocation2 + $0x488] sm:$0xff]
    %v182 = vld [vmem:[#allocation2 + $0x490] sm:$0xff]
    %v183 = vld [vmem:[#allocation2 + $0x498] sm:$0xff]
    %v184 = vld [vmem:[#allocation2 + $0x4a0] sm:$0xff]
    %v185 = vld [vmem:[#allocation2 + $0x4a8] sm:$0xff]
    %v186 = vld [vmem:[#allocation2 + $0x4b0] sm:$0xff]
    %v187 = vld [vmem:[#allocation2 + $0x4b8] sm:$0xff]
    %v188 = vld [vmem:[#allocation2 + $0x4c0] sm:$0xff]
    %v189 = vld [vmem:[#allocation2 + $0x4c8] sm:$0xff]
    %v190 = vld [vmem:[#allocation2 + $0x4d0] sm:$0xff]
    %v191 = vld [vmem:[#allocation2 + $0x4d8] sm:$0xff]
    %v192 = vld [vmem:[#allocation2 + $0x4e0] sm:$0xff]
    %v193 = vld [vmem:[#allocation2 + $0x4e8] sm:$0xff]
    %v194 = vld [vmem:[#allocation2 + $0x4f0] sm:$0xff]
    %v195 = vld [vmem:[#allocation2 + $0x4f8] sm:$0xff]
    %v196 = vld [vmem:[#allocation2 + $0x500] sm:$0xff]
    %v197 = vld [vmem:[#allocation2 + $0x508] sm:$0xff]
    %v198 = vld [vmem:[#allocation2 + $0x510] sm:$0xff]
    %v199 = vld [vmem:[#allocation2 + $0x518] sm:$0xff]
    %v200 = vld [vmem:[#allocation2 + $0x520] sm:$0xff]
    %v201 = vld [vmem:[#allocation2 + $0x528] sm:$0xff]
    %v202 = vld [vmem:[#allocation2 + $0x530] sm:$0xff]
    %v203 = vld [vmem:[#allocation2 + $0x538] sm:$0xff]
    %v204 = vld [vmem:[#allocation2 + $0x540] sm:$0xff]
    %v205 = vld [vmem:[#allocation2 + $0x548] sm:$0xff]
    %v206 = vld [vmem:[#allocation2 + $0x550] sm:$0xff]
    %v207 = vld [vmem:[#allocation2 + $0x558] sm:$0xff]
    %v208 = vld [vmem:[#allocation2 + $0x560] sm:$0xff]
    %v209 = vld [vmem:[#allocation2 + $0x568] sm:$0xff]
    %v210 = vld [vmem:[#allocation2 + $0x570] sm:$0xff]
    %v211 = vld [vmem:[#allocation2 + $0x578] sm:$0xff]
    %v212 = vld [vmem:[#allocation2 + $0x580] sm:$0xff]
    %v213 = vld [vmem:[#allocation2 + $0x588] sm:$0xff]
    %v214 = vld [vmem:[#allocation2 + $0x590] sm:$0xff]
    %v215 = vld [vmem:[#allocation2 + $0x598] sm:$0xff]
    %v216 = vld [vmem:[#allocation2 + $0x5a0] sm:$0xff]
    %v217 = vld [vmem:[#allocation2 + $0x5a8] sm:$0xff]
    %v218 = vld [vmem:[#allocation2 + $0x5b0] sm:$0xff]
    %v219 = vld [vmem:[#allocation2 + $0x5b8] sm:$0xff]
    %v220 = vld [vmem:[#allocation2 + $0x5c0] sm:$0xff]
    %v221 = vld [vmem:[#allocation2 + $0x5c8] sm:$0xff]
    %v222 = vld [vmem:[#allocation2 + $0x5d0] sm:$0xff]
    %v223 = vld [vmem:[#allocation2 + $0x5d8] sm:$0xff]
    %v224 = vld [vmem:[#allocation2 + $0x5e0] sm:$0xff]
    %v225 = vld [vmem:[#allocation2 + $0x5e8] sm:$0xff]
    %v226 = vld [vmem:[#allocation2 + $0x5f0] sm:$0xff]
    %v227 = vld [vmem:[#allocation2 + $0x5f8] sm:$0xff]
    %v228 = vld [vmem:[#allocation2 + $0x600] sm:$0xff]
    %v229 = vld [vmem:[#allocation2 + $0x608] sm:$0xff]
    %v230 = vld [vmem:[#allocation2 + $0x610] sm:$0xff]
    %v231 = vld [vmem:[#allocation2 + $0x618] sm:$0xff]
    %v232 = vld [vmem:[#allocation2 + $0x620] sm:$0xff]
    %v233 = vld [vmem:[#allocation2 + $0x628] sm:$0xff]
    %v234 = vld [vmem:[#allocation2 + $0x630] sm:$0xff]
    %v235 = vld [vmem:[#allocation2 + $0x638] sm:$0xff]
    %v236 = vld [vmem:[#allocation2 + $0x640] sm:$0xff]
    %v237 = vld [vmem:[#allocation2 + $0x648] sm:$0xff]
    %v238 = vld [vmem:[#allocation2 + $0x650] sm:$0xff]
    %v239 = vld [vmem:[#allocation2 + $0x658] sm:$0xff]
    %v240 = vld [vmem:[#allocation2 + $0x660] sm:$0xff]
    %v241 = vld [vmem:[#allocation2 + $0x668] sm:$0xff]
    %v242 = vld [vmem:[#allocation2 + $0x670] sm:$0xff]
    %v243 = vld [vmem:[#allocation2 + $0x678] sm:$0xff]
    %v244 = vld [vmem:[#allocation2 + $0x680] sm:$0xff]
    %v245 = vld [vmem:[#allocation2 + $0x688] sm:$0xff]
    %v246 = vld [vmem:[#allocation2 + $0x690] sm:$0xff]
    %v247 = vld [vmem:[#allocation2 + $0x698] sm:$0xff]
    %v248 = vld [vmem:[#allocation2 + $0x6a0] sm:$0xff]
    %v249 = vld [vmem:[#allocation2 + $0x6a8] sm:$0xff]
    %v250 = vld [vmem:[#allocation2 + $0x6b0] sm:$0xff]
    %v251 = vld [vmem:[#allocation2 + $0x6b8] sm:$0xff]
    %v252 = vld [vmem:[#allocation2 + $0x6c0] sm:$0xff]
    %v253 = vld [vmem:[#allocation2 + $0x6c8] sm:$0xff]
    %v254 = vld [vmem:[#allocation2 + $0x6d0] sm:$0xff]
    %v255 = vld [vmem:[#allocation2 + $0x6d8] sm:$0xff]
    %v256 = vld [vmem:[#allocation2 + $0x6e0] sm:$0xff]
    %v257 = vld [vmem:[#allocation2 + $0x6e8] sm:$0xff]
    %v258 = vld [vmem:[#allocation2 + $0x6f0] sm:$0xff]
    %v259 = vld [vmem:[#allocation2 + $0x6f8] sm:$0xff]
    %v260 = vld [vmem:[#allocation2 + $0x700] sm:$0xff]
    %v261 = vld [vmem:[#allocation2 + $0x708] sm:$0xff]
    %v262 = vld [vmem:[#allocation2 + $0x710] sm:$0xff]
    %v263 = vld [vmem:[#allocation2 + $0x718] sm:$0xff]
    %v264 = vld [vmem:[#allocation2 + $0x720] sm:$0xff]
    %v265 = vld [vmem:[#allocation2 + $0x728] sm:$0xff]
    %v266 = vld [vmem:[#allocation2 + $0x730] sm:$0xff]
    %v267 = vld [vmem:[#allocation2 + $0x738] sm:$0xff]
    %v268 = vld [vmem:[#allocation2 + $0x740] sm:$0xff]
    %v269 = vld [vmem:[#allocation2 + $0x748] sm:$0xff]
    %v270 = vld [vmem:[#allocation2 + $0x750] sm:$0xff]
    %v271 = vld [vmem:[#allocation2 + $0x758] sm:$0xff]
    %v272 = vld [vmem:[#allocation2 + $0x760] sm:$0xff]
    %v273 = vld [vmem:[#allocation2 + $0x768] sm:$0xff]
    %v274 = vld [vmem:[#allocation2 + $0x770] sm:$0xff]
    %v275 = vld [vmem:[#allocation2 + $0x778] sm:$0xff]
    %v276 = vld [vmem:[#allocation2 + $0x780] sm:$0xff]
    %v277 = vld [vmem:[#allocation2 + $0x788] sm:$0xff]
    %v278 = vld [vmem:[#allocation2 + $0x790] sm:$0xff]
    %v279 = vld [vmem:[#allocation2 + $0x798] sm:$0xff]
    %v280 = vld [vmem:[#allocation2 + $0x7a0] sm:$0xff]
    %v281 = vld [vmem:[#allocation2 + $0x7a8] sm:$0xff]
    %v282 = vld [vmem:[#allocation2 + $0x7b0] sm:$0xff]
    %v283 = vld [vmem:[#allocation2 + $0x7b8] sm:$0xff]
    %v284 = vld [vmem:[#allocation2 + $0x7c0] sm:$0xff]
    %v285 = vld [vmem:[#allocation2 + $0x7c8] sm:$0xff]
    %v286 = vld [vmem:[#allocation2 + $0x7d0] sm:$0xff]
    %v287 = vld [vmem:[#allocation2 + $0x7d8] sm:$0xff]
    %v288 = vld [vmem:[#allocation2 + $0x7e0] sm:$0xff]
    %v289 = vld [vmem:[#allocation2 + $0x7e8] sm:$0xff]
    %v290 = vld [vmem:[#allocation2 + $0x7f0] sm:$0xff]
    %v291 = vld [vmem:[#allocation2 + $0x7f8] sm:$0xff]
    %292 = vmatpush.msra.mxu0 %v156
    %293 = vmatpush.msra.mxu0 %v148
    %294 = vmatpush.msra.mxu0 %v140
    %295 = vmatpush.msra.mxu0 %v132
    %296 = vmatpush.msra.mxu0 %v124
    %297 = vmatpush.msra.mxu0 %v116
    %298 = vmatpush.msra.mxu0 %v108
    %299 = vmatpush.msra.mxu0 %v100
    %300 = vmatpush.msra.mxu0 %v92
    %301 = vmatpush.msra.mxu0 %v84
    %302 = vmatpush.msra.mxu0 %v76
    %303 = vmatpush.msra.mxu0 %v68
    %304 = vmatpush.msra.mxu0 %v60
    %305 = vmatpush.msra.mxu0 %v52
    %306 = vmatpush.msra.mxu0 %v44
    %307 = vmatpush.msra.mxu0 %v36
    %308 = vmatmul.f32.gmra.mxu0 %v34
    %v309 = vpop.f32.mrf.mxu0
    %v310 = vadd.f32 0.0, %v309
    %311 = vdwg.mxu0
    %312 = vmatpush.msra.mxu0 %v284
    %313 = vmatpush.msra.mxu0 %v276
    %314 = vmatpush.msra.mxu0 %v268
    %315 = vmatpush.msra.mxu0 %v260
    %316 = vmatpush.msra.mxu0 %v252
    %317 = vmatpush.msra.mxu0 %v244
    %318 = vmatpush.msra.mxu0 %v236
    %319 = vmatpush.msra.mxu0 %v228
    %320 = vmatpush.msra.mxu0 %v220
    %321 = vmatpush.msra.mxu0 %v212
    %322 = vmatpush.msra.mxu0 %v204
    %323 = vmatpush.msra.mxu0 %v196
    %324 = vmatpush.msra.mxu0 %v188
    %325 = vmatpush.msra.mxu0 %v180
    %326 = vmatpush.msra.mxu0 %v172
    %327 = vmatpush.msra.mxu0 %v164
    %328 = vmatmul.f32.gmra.mxu0 %v35
    %v329 = vpop.f32.mrf.mxu0
    %v330 = vadd.f32 %v310, %v329
    %331 = vdwg.mxu0
    %332 = vmatpush.msra.mxu0 %v157
    %333 = vmatpush.msra.mxu0 %v149
    %334 = vmatpush.msra.mxu0 %v141
    %335 = vmatpush.msra.mxu0 %v133
    %336 = vmatpush.msra.mxu0 %v125
    %337 = vmatpush.msra.mxu0 %v117
    %338 = vmatpush.msra.mxu0 %v109
    %339 = vmatpush.msra.mxu0 %v101
    %340 = vmatpush.msra.mxu0 %v93
    %341 = vmatpush.msra.mxu0 %v85
    %342 = vmatpush.msra.mxu0 %v77
    %343 = vmatpush.msra.mxu0 %v69
    %344 = vmatpush.msra.mxu0 %v61
    %345 = vmatpush.msra.mxu0 %v53
    %346 = vmatpush.msra.mxu0 %v45
    %347 = vmatpush.msra.mxu0 %v37
    %348 = vmatmul.f32.gmra.mxu0 %v34
    %v349 = vpop.f32.mrf.mxu0
    %v350 = vadd.f32 0.0, %v349
    %351 = vdwg.mxu0
    %352 = vmatpush.msra.mxu0 %v285
    %353 = vmatpush.msra.mxu0 %v277
    %354 = vmatpush.msra.mxu0 %v269
    %355 = vmatpush.msra.mxu0 %v261
    %356 = vmatpush.msra.mxu0 %v253
    %357 = vmatpush.msra.mxu0 %v245
    %358 = vmatpush.msra.mxu0 %v237
    %359 = vmatpush.msra.mxu0 %v229
    %360 = vmatpush.msra.mxu0 %v221
    %361 = vmatpush.msra.mxu0 %v213
    %362 = vmatpush.msra.mxu0 %v205
    %363 = vmatpush.msra.mxu0 %v197
    %364 = vmatpush.msra.mxu0 %v189
    %365 = vmatpush.msra.mxu0 %v181
    %366 = vmatpush.msra.mxu0 %v173
    %367 = vmatpush.msra.mxu0 %v165
    %368 = vmatmul.f32.gmra.mxu0 %v35
    %v369 = vpop.f32.mrf.mxu0
    %v370 = vadd.f32 %v350, %v369
    %371 = vdwg.mxu0
    %372 = vmatpush.msra.mxu0 %v158
    %373 = vmatpush.msra.mxu0 %v150
    %374 = vmatpush.msra.mxu0 %v142
    %375 = vmatpush.msra.mxu0 %v134
    %376 = vmatpush.msra.mxu0 %v126
    %377 = vmatpush.msra.mxu0 %v118
    %378 = vmatpush.msra.mxu0 %v110
    %379 = vmatpush.msra.mxu0 %v102
    %380 = vmatpush.msra.mxu0 %v94
    %381 = vmatpush.msra.mxu0 %v86
    %382 = vmatpush.msra.mxu0 %v78
    %383 = vmatpush.msra.mxu0 %v70
    %384 = vmatpush.msra.mxu0 %v62
    %385 = vmatpush.msra.mxu0 %v54
    %386 = vmatpush.msra.mxu0 %v46
    %387 = vmatpush.msra.mxu0 %v38
    %388 = vmatmul.f32.gmra.mxu0 %v34
    %v389 = vpop.f32.mrf.mxu0
    %v390 = vadd.f32 0.0, %v389
    %391 = vdwg.mxu0
    %392 = vmatpush.msra.mxu0 %v286
    %393 = vmatpush.msra.mxu0 %v278
    %394 = vmatpush.msra.mxu0 %v270
    %395 = vmatpush.msra.mxu0 %v262
    %396 = vmatpush.msra.mxu0 %v254
    %397 = vmatpush.msra.mxu0 %v246
    %398 = vmatpush.msra.mxu0 %v238
    %399 = vmatpush.msra.mxu0 %v230
    %400 = vmatpush.msra.mxu0 %v222
    %401 = vmatpush.msra.mxu0 %v214
    %402 = vmatpush.msra.mxu0 %v206
    %403 = vmatpush.msra.mxu0 %v198
    %404 = vmatpush.msra.mxu0 %v190
    %405 = vmatpush.msra.mxu0 %v182
    %406 = vmatpush.msra.mxu0 %v174
    %407 = vmatpush.msra.mxu0 %v166
    %408 = vmatmul.f32.gmra.mxu0 %v35
    %v409 = vpop.f32.mrf.mxu0
    %v410 = vadd.f32 %v390, %v409
    %411 = vdwg.mxu0
    %412 = vmatpush.msra.mxu0 %v159
    %413 = vmatpush.msra.mxu0 %v151
    %414 = vmatpush.msra.mxu0 %v143
    %415 = vmatpush.msra.mxu0 %v135
    %416 = vmatpush.msra.mxu0 %v127
    %417 = vmatpush.msra.mxu0 %v119
    %418 = vmatpush.msra.mxu0 %v111
    %419 = vmatpush.msra.mxu0 %v103
    %420 = vmatpush.msra.mxu0 %v95
    %421 = vmatpush.msra.mxu0 %v87
    %422 = vmatpush.msra.mxu0 %v79
    %423 = vmatpush.msra.mxu0 %v71
    %424 = vmatpush.msra.mxu0 %v63
    %425 = vmatpush.msra.mxu0 %v55
    %426 = vmatpush.msra.mxu0 %v47
    %427 = vmatpush.msra.mxu0 %v39
    %428 = vmatmul.f32.gmra.mxu0 %v34
    %v429 = vpop.f32.mrf.mxu0
    %v430 = vadd.f32 0.0, %v429
    %431 = vdwg.mxu0
    %432 = vmatpush.msra.mxu0 %v287
    %433 = vmatpush.msra.mxu0 %v279
    %434 = vmatpush.msra.mxu0 %v271
    %435 = vmatpush.msra.mxu0 %v263
    %436 = vmatpush.msra.mxu0 %v255
    %437 = vmatpush.msra.mxu0 %v247
    %438 = vmatpush.msra.mxu0 %v239
    %439 = vmatpush.msra.mxu0 %v231
    %440 = vmatpush.msra.mxu0 %v223
    %441 = vmatpush.msra.mxu0 %v215
    %442 = vmatpush.msra.mxu0 %v207
    %443 = vmatpush.msra.mxu0 %v199
    %444 = vmatpush.msra.mxu0 %v191
    %445 = vmatpush.msra.mxu0 %v183
    %446 = vmatpush.msra.mxu0 %v175
    %447 = vmatpush.msra.mxu0 %v167
    %448 = vmatmul.f32.gmra.mxu0 %v35
    %v449 = vpop.f32.mrf.mxu0
    %v450 = vadd.f32 %v430, %v449
    %451 = vdwg.mxu0
    %452 = vmatpush.msra.mxu0 %v160
    %453 = vmatpush.msra.mxu0 %v152
    %454 = vmatpush.msra.mxu0 %v144
    %455 = vmatpush.msra.mxu0 %v136
    %456 = vmatpush.msra.mxu0 %v128
    %457 = vmatpush.msra.mxu0 %v120
    %458 = vmatpush.msra.mxu0 %v112
    %459 = vmatpush.msra.mxu0 %v104
    %460 = vmatpush.msra.mxu0 %v96
    %461 = vmatpush.msra.mxu0 %v88
    %462 = vmatpush.msra.mxu0 %v80
    %463 = vmatpush.msra.mxu0 %v72
    %464 = vmatpush.msra.mxu0 %v64
    %465 = vmatpush.msra.mxu0 %v56
    %466 = vmatpush.msra.mxu0 %v48
    %467 = vmatpush.msra.mxu0 %v40
    %468 = vmatmul.f32.gmra.mxu0 %v34
    %v469 = vpop.f32.mrf.mxu0
    %v470 = vadd.f32 0.0, %v469
    %471 = vdwg.mxu0
    %472 = vmatpush.msra.mxu0 %v288
    %473 = vmatpush.msra.mxu0 %v280
    %474 = vmatpush.msra.mxu0 %v272
    %475 = vmatpush.msra.mxu0 %v264
    %476 = vmatpush.msra.mxu0 %v256
    %477 = vmatpush.msra.mxu0 %v248
    %478 = vmatpush.msra.mxu0 %v240
    %479 = vmatpush.msra.mxu0 %v232
    %480 = vmatpush.msra.mxu0 %v224
    %481 = vmatpush.msra.mxu0 %v216
    %482 = vmatpush.msra.mxu0 %v208
    %483 = vmatpush.msra.mxu0 %v200
    %484 = vmatpush.msra.mxu0 %v192
    %485 = vmatpush.msra.mxu0 %v184
    %486 = vmatpush.msra.mxu0 %v176
    %487 = vmatpush.msra.mxu0 %v168
    %488 = vmatmul.f32.gmra.mxu0 %v35
    %v489 = vpop.f32.mrf.mxu0
    %v490 = vadd.f32 %v470, %v489
    %491 = vdwg.mxu0
    %492 = vmatpush.msra.mxu0 %v161
    %493 = vmatpush.msra.mxu0 %v153
    %494 = vmatpush.msra.mxu0 %v145
    %495 = vmatpush.msra.mxu0 %v137
    %496 = vmatpush.msra.mxu0 %v129
    %497 = vmatpush.msra.mxu0 %v121
    %498 = vmatpush.msra.mxu0 %v113
    %499 = vmatpush.msra.mxu0 %v105
    %500 = vmatpush.msra.mxu0 %v97
    %501 = vmatpush.msra.mxu0 %v89
    %502 = vmatpush.msra.mxu0 %v81
    %503 = vmatpush.msra.mxu0 %v73
    %504 = vmatpush.msra.mxu0 %v65
    %505 = vmatpush.msra.mxu0 %v57
    %506 = vmatpush.msra.mxu0 %v49
    %507 = vmatpush.msra.mxu0 %v41
    %508 = vmatmul.f32.gmra.mxu0 %v34
    %v509 = vpop.f32.mrf.mxu0
    %v510 = vadd.f32 0.0, %v509
    %511 = vdwg.mxu0
    %512 = vmatpush.msra.mxu0 %v289
    %513 = vmatpush.msra.mxu0 %v281
    %514 = vmatpush.msra.mxu0 %v273
    %515 = vmatpush.msra.mxu0 %v265
    %516 = vmatpush.msra.mxu0 %v257
    %517 = vmatpush.msra.mxu0 %v249
    %518 = vmatpush.msra.mxu0 %v241
    %519 = vmatpush.msra.mxu0 %v233
    %520 = vmatpush.msra.mxu0 %v225
    %521 = vmatpush.msra.mxu0 %v217
    %522 = vmatpush.msra.mxu0 %v209
    %523 = vmatpush.msra.mxu0 %v201
    %524 = vmatpush.msra.mxu0 %v193
    %525 = vmatpush.msra.mxu0 %v185
    %526 = vmatpush.msra.mxu0 %v177
    %527 = vmatpush.msra.mxu0 %v169
    %528 = vmatmul.f32.gmra.mxu0 %v35
    %v529 = vpop.f32.mrf.mxu0
    %v530 = vadd.f32 %v510, %v529
    %531 = vdwg.mxu0
    %532 = vmatpush.msra.mxu0 %v162
    %533 = vmatpush.msra.mxu0 %v154
    %534 = vmatpush.msra.mxu0 %v146
    %535 = vmatpush.msra.mxu0 %v138
    %536 = vmatpush.msra.mxu0 %v130
    %537 = vmatpush.msra.mxu0 %v122
    %538 = vmatpush.msra.mxu0 %v114
    %539 = vmatpush.msra.mxu0 %v106
    %540 = vmatpush.msra.mxu0 %v98
    %541 = vmatpush.msra.mxu0 %v90
    %542 = vmatpush.msra.mxu0 %v82
    %543 = vmatpush.msra.mxu0 %v74
    %544 = vmatpush.msra.mxu0 %v66
    %545 = vmatpush.msra.mxu0 %v58
    %546 = vmatpush.msra.mxu0 %v50
    %547 = vmatpush.msra.mxu0 %v42
    %548 = vmatmul.f32.gmra.mxu0 %v34
    %v549 = vpop.f32.mrf.mxu0
    %v550 = vadd.f32 0.0, %v549
    %551 = vdwg.mxu0
    %552 = vmatpush.msra.mxu0 %v290
    %553 = vmatpush.msra.mxu0 %v282
    %554 = vmatpush.msra.mxu0 %v274
    %555 = vmatpush.msra.mxu0 %v266
    %556 = vmatpush.msra.mxu0 %v258
    %557 = vmatpush.msra.mxu0 %v250
    %558 = vmatpush.msra.mxu0 %v242
    %559 = vmatpush.msra.mxu0 %v234
    %560 = vmatpush.msra.mxu0 %v226
    %561 = vmatpush.msra.mxu0 %v218
    %562 = vmatpush.msra.mxu0 %v210
    %563 = vmatpush.msra.mxu0 %v202
    %564 = vmatpush.msra.mxu0 %v194
    %565 = vmatpush.msra.mxu0 %v186
    %566 = vmatpush.msra.mxu0 %v178
    %567 = vmatpush.msra.mxu0 %v170
    %568 = vmatmul.f32.gmra.mxu0 %v35
    %v569 = vpop.f32.mrf.mxu0
    %v570 = vadd.f32 %v550, %v569
    %571 = vdwg.mxu0
    %572 = vmatpush.msra.mxu0 %v163
    %573 = vmatpush.msra.mxu0 %v155
    %574 = vmatpush.msra.mxu0 %v147
    %575 = vmatpush.msra.mxu0 %v139
    %576 = vmatpush.msra.mxu0 %v131
    %577 = vmatpush.msra.mxu0 %v123
    %578 = vmatpush.msra.mxu0 %v115
    %579 = vmatpush.msra.mxu0 %v107
    %580 = vmatpush.msra.mxu0 %v99
    %581 = vmatpush.msra.mxu0 %v91
    %582 = vmatpush.msra.mxu0 %v83
    %583 = vmatpush.msra.mxu0 %v75
    %584 = vmatpush.msra.mxu0 %v67
    %585 = vmatpush.msra.mxu0 %v59
    %586 = vmatpush.msra.mxu0 %v51
    %587 = vmatpush.msra.mxu0 %v43
    %588 = vmatmul.f32.gmra.mxu0 %v34
    %v589 = vpop.f32.mrf.mxu0
    %v590 = vadd.f32 0.0, %v589
    %591 = vdwg.mxu0
    %592 = vmatpush.msra.mxu0 %v291
    %593 = vmatpush.msra.mxu0 %v283
    %594 = vmatpush.msra.mxu0 %v275
    %595 = vmatpush.msra.mxu0 %v267
    %596 = vmatpush.msra.mxu0 %v259
    %597 = vmatpush.msra.mxu0 %v251
    %598 = vmatpush.msra.mxu0 %v243
    %599 = vmatpush.msra.mxu0 %v235
    %600 = vmatpush.msra.mxu0 %v227
    %601 = vmatpush.msra.mxu0 %v219
    %602 = vmatpush.msra.mxu0 %v211
    %603 = vmatpush.msra.mxu0 %v203
    %604 = vmatpush.msra.mxu0 %v195
    %605 = vmatpush.msra.mxu0 %v187
    %606 = vmatpush.msra.mxu0 %v179
    %607 = vmatpush.msra.mxu0 %v171
    %608 = vmatmul.f32.gmra.mxu0 %v35
    %v609 = vpop.f32.mrf.mxu0
    %v610 = vadd.f32 %v590, %v609
    %611 = vdwg.mxu0
    %v612 = vld [vmem:[%s2] sm:$0xff]
    %v613 = vld [vmem:[%s2 + $0x8] sm:$0xff]
    %v614 = vld [vmem:[%s3] sm:$0xff]
    %v615 = vld [vmem:[%s3 + $0x8] sm:$0xff]
    %617 = vset.pattern.permute.xlu0 0
    %618 = vperm.xlu0 %617, %v614
    %v619 = vpop.permute.xlu0 %618
    %622 = vset.pattern.permute.xlu0 0
    %623 = vperm.xlu0 %622, %v615
    %v624 = vpop.permute.xlu0 %623
    %vm626 = vcmask 64512
    %v628 = vsel %vm626, %v612, 0
    %v631 = vsel %vm626, %v613, 0
    %633 = vmatpush.msra.mxu0 0.0
    %634 = vmatpush.msra.mxu0 0.0
    %635 = vmatpush.msra.mxu0 0.0
    %636 = vmatpush.msra.mxu0 0.0
    %637 = vmatpush.msra.mxu0 0.0
    %638 = vmatpush.msra.mxu0 0.0
    %639 = vmatpush.msra.mxu0 0.0
    %640 = vmatpush.msra.mxu0 0.0
    %641 = vmatpush.msra.mxu0 0.0
    %642 = vmatpush.msra.mxu0 0.0
    %643 = vmatpush.msra.mxu0 0.0
    %644 = vmatpush.msra.mxu0 0.0
    %645 = vmatpush.msra.mxu0 0.0
    %646 = vmatpush.msra.mxu0 0.0
    %647 = vmatpush.msra.mxu0 0.0
    %648 = vmatpush.msra.mxu0 %v330
    %649 = vmatmul.f32.gmra.mxu0 %v628
    %v650 = vpop.f32.mrf.mxu0
    %v651 = vadd.f32 %v619, %v650
    %652 = vmatmul.f32.gmra.mxu0 %v631
    %v653 = vpop.f32.mrf.mxu0
    %v654 = vadd.f32 %v624, %v653
    %655 = vdwg.mxu0
    %656 = vmatpush.msra.mxu0 0.0
    %657 = vmatpush.msra.mxu0 0.0
    %658 = vmatpush.msra.mxu0 0.0
    %659 = vmatpush.msra.mxu0 0.0
    %660 = vmatpush.msra.mxu0 0.0
    %661 = vmatpush.msra.mxu0 0.0
    %662 = vmatpush.msra.mxu0 0.0
    %663 = vmatpush.msra.mxu0 0.0
    %664 = vmatpush.msra.mxu0 0.0
    %665 = vmatpush.msra.mxu0 0.0
    %666 = vmatpush.msra.mxu0 0.0
    %667 = vmatpush.msra.mxu0 0.0
    %668 = vmatpush.msra.mxu0 0.0
    %669 = vmatpush.msra.mxu0 0.0
    %670 = vmatpush.msra.mxu0 0.0
    %671 = vmatpush.msra.mxu0 %v370
    %672 = vmatmul.f32.gmra.mxu0 %v628
    %v673 = vpop.f32.mrf.mxu0
    %v674 = vadd.f32 %v619, %v673
    %675 = vmatmul.f32.gmra.mxu0 %v631
    %v676 = vpop.f32.mrf.mxu0
    %v677 = vadd.f32 %v624, %v676
    %678 = vdwg.mxu0
    %679 = vmatpush.msra.mxu0 0.0
    %680 = vmatpush.msra.mxu0 0.0
    %681 = vmatpush.msra.mxu0 0.0
    %682 = vmatpush.msra.mxu0 0.0
    %683 = vmatpush.msra.mxu0 0.0
    %684 = vmatpush.msra.mxu0 0.0
    %685 = vmatpush.msra.mxu0 0.0
    %686 = vmatpush.msra.mxu0 0.0
    %687 = vmatpush.msra.mxu0 0.0
    %688 = vmatpush.msra.mxu0 0.0
    %689 = vmatpush.msra.mxu0 0.0
    %690 = vmatpush.msra.mxu0 0.0
    %691 = vmatpush.msra.mxu0 0.0
    %692 = vmatpush.msra.mxu0 0.0
    %693 = vmatpush.msra.mxu0 0.0
    %694 = vmatpush.msra.mxu0 %v410
    %695 = vmatmul.f32.gmra.mxu0 %v628
    %v696 = vpop.f32.mrf.mxu0
    %v697 = vadd.f32 %v619, %v696
    %698 = vmatmul.f32.gmra.mxu0 %v631
    %v699 = vpop.f32.mrf.mxu0
    %v700 = vadd.f32 %v624, %v699
    %701 = vdwg.mxu0
    %702 = vmatpush.msra.mxu0 0.0
    %703 = vmatpush.msra.mxu0 0.0
    %704 = vmatpush.msra.mxu0 0.0
    %705 = vmatpush.msra.mxu0 0.0
    %706 = vmatpush.msra.mxu0 0.0
    %707 = vmatpush.msra.mxu0 0.0
    %708 = vmatpush.msra.mxu0 0.0
    %709 = vmatpush.msra.mxu0 0.0
    %710 = vmatpush.msra.mxu0 0.0
    %711 = vmatpush.msra.mxu0 0.0
    %712 = vmatpush.msra.mxu0 0.0
    %713 = vmatpush.msra.mxu0 0.0
    %714 = vmatpush.msra.mxu0 0.0
    %715 = vmatpush.msra.mxu0 0.0
    %716 = vmatpush.msra.mxu0 0.0
    %717 = vmatpush.msra.mxu0 %v450
    %718 = vmatmul.f32.gmra.mxu0 %v628
    %v719 = vpop.f32.mrf.mxu0
    %v720 = vadd.f32 %v619, %v719
    %721 = vmatmul.f32.gmra.mxu0 %v631
    %v722 = vpop.f32.mrf.mxu0
    %v723 = vadd.f32 %v624, %v722
    %724 = vdwg.mxu0
    %725 = vmatpush.msra.mxu0 0.0
    %726 = vmatpush.msra.mxu0 0.0
    %727 = vmatpush.msra.mxu0 0.0
    %728 = vmatpush.msra.mxu0 0.0
    %729 = vmatpush.msra.mxu0 0.0
    %730 = vmatpush.msra.mxu0 0.0
    %731 = vmatpush.msra.mxu0 0.0
    %732 = vmatpush.msra.mxu0 0.0
    %733 = vmatpush.msra.mxu0 0.0
    %734 = vmatpush.msra.mxu0 0.0
    %735 = vmatpush.msra.mxu0 0.0
    %736 = vmatpush.msra.mxu0 0.0
    %737 = vmatpush.msra.mxu0 0.0
    %738 = vmatpush.msra.mxu0 0.0
    %739 = vmatpush.msra.mxu0 0.0
    %740 = vmatpush.msra.mxu0 %v490
    %741 = vmatmul.f32.gmra.mxu0 %v628
    %v742 = vpop.f32.mrf.mxu0
    %v743 = vadd.f32 %v619, %v742
    %744 = vmatmul.f32.gmra.mxu0 %v631
    %v745 = vpop.f32.mrf.mxu0
    %v746 = vadd.f32 %v624, %v745
    %747 = vdwg.mxu0
    %748 = vmatpush.msra.mxu0 0.0
    %749 = vmatpush.msra.mxu0 0.0
    %750 = vmatpush.msra.mxu0 0.0
    %751 = vmatpush.msra.mxu0 0.0
    %752 = vmatpush.msra.mxu0 0.0
    %753 = vmatpush.msra.mxu0 0.0
    %754 = vmatpush.msra.mxu0 0.0
    %755 = vmatpush.msra.mxu0 0.0
    %756 = vmatpush.msra.mxu0 0.0
    %757 = vmatpush.msra.mxu0 0.0
    %758 = vmatpush.msra.mxu0 0.0
    %759 = vmatpush.msra.mxu0 0.0
    %760 = vmatpush.msra.mxu0 0.0
    %761 = vmatpush.msra.mxu0 0.0
    %762 = vmatpush.msra.mxu0 0.0
    %763 = vmatpush.msra.mxu0 %v530
    %764 = vmatmul.f32.gmra.mxu0 %v628
    %v765 = vpop.f32.mrf.mxu0
    %v766 = vadd.f32 %v619, %v765
    %767 = vmatmul.f32.gmra.mxu0 %v631
    %v768 = vpop.f32.mrf.mxu0
    %v769 = vadd.f32 %v624, %v768
    %770 = vdwg.mxu0
    %771 = vmatpush.msra.mxu0 0.0
    %772 = vmatpush.msra.mxu0 0.0
    %773 = vmatpush.msra.mxu0 0.0
    %774 = vmatpush.msra.mxu0 0.0
    %775 = vmatpush.msra.mxu0 0.0
    %776 = vmatpush.msra.mxu0 0.0
    %777 = vmatpush.msra.mxu0 0.0
    %778 = vmatpush.msra.mxu0 0.0
    %779 = vmatpush.msra.mxu0 0.0
    %780 = vmatpush.msra.mxu0 0.0
    %781 = vmatpush.msra.mxu0 0.0
    %782 = vmatpush.msra.mxu0 0.0
    %783 = vmatpush.msra.mxu0 0.0
    %784 = vmatpush.msra.mxu0 0.0
    %785 = vmatpush.msra.mxu0 0.0
    %786 = vmatpush.msra.mxu0 %v570
    %787 = vmatmul.f32.gmra.mxu0 %v628
    %v788 = vpop.f32.mrf.mxu0
    %v789 = vadd.f32 %v619, %v788
    %790 = vmatmul.f32.gmra.mxu0 %v631
    %v791 = vpop.f32.mrf.mxu0
    %v792 = vadd.f32 %v624, %v791
    %793 = vdwg.mxu0
    %794 = vmatpush.msra.mxu0 0.0
    %795 = vmatpush.msra.mxu0 0.0
    %796 = vmatpush.msra.mxu0 0.0
    %797 = vmatpush.msra.mxu0 0.0
    %798 = vmatpush.msra.mxu0 0.0
    %799 = vmatpush.msra.mxu0 0.0
    %800 = vmatpush.msra.mxu0 0.0
    %801 = vmatpush.msra.mxu0 0.0
    %802 = vmatpush.msra.mxu0 0.0
    %803 = vmatpush.msra.mxu0 0.0
    %804 = vmatpush.msra.mxu0 0.0
    %805 = vmatpush.msra.mxu0 0.0
    %806 = vmatpush.msra.mxu0 0.0
    %807 = vmatpush.msra.mxu0 0.0
    %808 = vmatpush.msra.mxu0 0.0
    %809 = vmatpush.msra.mxu0 %v610
    %810 = vmatmul.f32.gmra.mxu0 %v628
    %v811 = vpop.f32.mrf.mxu0
    %v812 = vadd.f32 %v619, %v811
    %813 = vmatmul.f32.gmra.mxu0 %v631
    %v814 = vpop.f32.mrf.mxu0
    %v815 = vadd.f32 %v624, %v814
    %816 = vdwg.mxu0
    %817 = vst [vmem:[#allocation5] sm:$0xff] %v651
    %818 = vst [vmem:[#allocation5 + $0x8] sm:$0xff] %v674
    %819 = vst [vmem:[#allocation5 + $0x10] sm:$0xff] %v697
    %820 = vst [vmem:[#allocation5 + $0x18] sm:$0xff] %v720
    %821 = vst [vmem:[#allocation5 + $0x20] sm:$0xff] %v743
    %822 = vst [vmem:[#allocation5 + $0x28] sm:$0xff] %v766
    %823 = vst [vmem:[#allocation5 + $0x30] sm:$0xff] %v789
    %824 = vst [vmem:[#allocation5 + $0x38] sm:$0xff] %v812
    %825 = vst [vmem:[#allocation5 + $0x40] sm:$0xff] %v654
    %826 = vst [vmem:[#allocation5 + $0x48] sm:$0xff] %v677
    %827 = vst [vmem:[#allocation5 + $0x50] sm:$0xff] %v700
    %828 = vst [vmem:[#allocation5 + $0x58] sm:$0xff] %v723
    %829 = vst [vmem:[#allocation5 + $0x60] sm:$0xff] %v746
    %830 = vst [vmem:[#allocation5 + $0x68] sm:$0xff] %v769
    %831 = vst [vmem:[#allocation5 + $0x70] sm:$0xff] %v792
    %832 = vst [vmem:[#allocation5 + $0x78] sm:$0xff] %v815
    // Predicated region
    $region22: #{tpu_custom_call.1} parent=1 // pred_check
      _
    $region23: #{tpu_custom_call.1} parent=1 // pred_check_branch
      %834 = sbr.rel (0) target = $region25
    $region24: #{tpu_custom_call.1} parent=1 // pred_region
      %836 = vsyncadd [#allocation4], 0
      %s837 = sshll.u32 [#allocation5], 4
      %s838 = int_to_ptr.vmem [resolvable:$true] %s837
      %s839 = sshll.u32 %s4, 4
      %s840 = int_to_ptr.hbm [resolvable:$true] %s839
      %845 = dma.vmem_to_hbm [thread:$0]  %s838, 2048, %s840, [#allocation4], 1024, 1024, 64
    $region25: #{tpu_custom_call.1} parent=1 // pred_fallthru
      _
    // Predicated region
    $region26: #{tpu_custom_call.1} parent=1 // pred_check
      _
    $region27: #{tpu_custom_call.1} parent=1 // pred_check_branch
      %847 = sbr.rel (0) target = $region29
    $region28: #{tpu_custom_call.1} parent=1 // pred_region
      %849 = dma.done [#allocation4], 2048
    $region29: #{tpu_custom_call.1} parent=1 // pred_fallthru
      _
    %850 = vsyncpa [#allocation3], 1
    %851 = vsyncpa [#allocation4], 1

</llo_original>
